<compile_context>
chip_gen: v7x
topology: tpu7x:2x2x1
jax: 0.10.0
libtpu: 0.0.40
codegen_flags: <defaults>
</compile_context>

<pallas_src>
import functools

import jax
import jax.numpy as jnp
from jax.experimental import pallas as pl
from jax.experimental.pallas import tpu as pltpu


def _pad_to(x, m):
    return -(-x // m) * m


def _softmax_rows(energy):
    """Row-wise softmax over the last axis of a (TB, P) tile."""
    mx = jnp.max(energy, axis=-1, keepdims=True)
    e = jnp.exp(energy - mx)
    denom = jnp.sum(e, axis=-1, keepdims=True)
    # EUP approximate reciprocal + one Newton step (restores full f32 accuracy).
    r = pl.reciprocal(denom, approx=True)
    r = r * (2.0 - denom * r)
    return e * r


def _attn_body(scale, q_ref, kt_ref, vt_ref, m_ref, o_ref):
    # Lane-dense layout: K/V tiles are (TB, P, D) so the big D axis is on the
    # 128-lane axis.  Per-batch M=1 "matmuls" cannot use the MXU effectively,
    # so both contractions are broadcast-multiply + reduce on the VPU/XLU.
    q = q_ref[...].astype(jnp.float32) * scale        # (TB, Dk) -- scale folded into Q
    kt = kt_ref[...].astype(jnp.float32)              # (TB, P, Dk)

    # energy[b, p] = sum_d q[b, d] * K[b, d, p]   (lane reduce over Dk)
    energy = jnp.sum(q[:, None, :] * kt, axis=-1)     # (TB, P)

    if m_ref is not None:
        # Multiplicative mask (applied before scaling in PyTorch; the scalar
        # scale commutes, so folding it into Q is equivalent).
        energy = energy * m_ref[...].astype(jnp.float32)

    attn = _softmax_rows(energy)                      # (TB, P)

    vt = vt_ref[...].astype(jnp.float32)              # (TB, P, Dv)
    # out[b, v] = sum_p attn[b, p] * V[b, v, p]   (sublane reduce over P)
    out = jnp.sum(attn[:, :, None] * vt, axis=1)      # (TB, Dv)
    o_ref[...] = out.astype(o_ref.dtype)


def _attn_kernel_masked(scale, q_ref, kt_ref, vt_ref, m_ref, o_ref):
    _attn_body(scale, q_ref, kt_ref, vt_ref, m_ref, o_ref)


def _attn_kernel_nomask(scale, q_ref, kt_ref, vt_ref, o_ref):
    _attn_body(scale, q_ref, kt_ref, vt_ref, None, o_ref)


def _vmem_limit_bytes():
    """Scoped-VMEM limit to request: ~3/4 of physical, capped at 96 MiB.
    (128 MiB physical on v5e/v6e -> 96 MiB; 64 MiB on v7x -> 48 MiB.)"""
    cap = 128 << 20
    try:
        info = pltpu.get_tpu_info()
        cap = int(getattr(info, "vmem_capacity_bytes", cap))
    except Exception:
        pass
    return int(min(cap * 3 // 4, 96 << 20))


def _choose_batch_block(B, Dk, Dv, P, has_mask, vmem_limit):
    """Pick TB (batch rows per grid step).

    Targets ~8 MiB of raw HBM traffic per step, bounded by an (8,128)
    padding-aware, double-buffered VMEM estimate (including the two in-kernel
    (TB, P, D) product temporaries), and capped so the grid has >= 2 blocks
    (both v7x TensorCores get work through the 'parallel' axis).
    """
    if B <= 8:
        return B
    # Raw HBM bytes moved per batch row (f32).
    raw = 4 * (Dk + P * Dk + P * Dv + Dv + (P if has_mask else 0))
    # Padded VMEM bytes per batch row: last two dims of every tile round up to
    # (8, 128); TB itself is kept a multiple of 8.
    q_b = _pad_to(Dk, 128) * 4
    k_b = _pad_to(P, 8) * _pad_to(Dk, 128) * 4
    v_b = _pad_to(P, 8) * _pad_to(Dv, 128) * 4
    o_b = _pad_to(Dv, 128) * 4
    m_b = _pad_to(P, 128) * 4 if has_mask else 0
    # 2x double-buffered I/O tiles + the two 3-D product temporaries.
    vmem_per_batch = 2 * (q_b + k_b + v_b + o_b + m_b) + (k_b + v_b)
    vmem_budget = min(vmem_limit * 2 // 3, 48 << 20)

    tb_traffic = (8 << 20) // max(raw, 1)
    tb_vmem = vmem_budget // max(vmem_per_batch, 1)
    tb_two_blocks = _pad_to(-(-B // 2), 8)       # keep >= 2 grid blocks (v7x)
    tb = min(tb_traffic, tb_vmem, tb_two_blocks)
    tb = max(8, (tb // 8) * 8)                   # multiple of 8: (8,128) rule
    # TODO(synk): if even TB=8 overflows the budget (huge P), switch to a
    # second "arbitrary" P-axis grid with online-softmax accumulators.
    return tb


def dot_product_attention(Q, K, V, mask=None, *, block_b=None, kv_transposed=False):
    """Pallas DotProductAttention.

    Q: [B, Dk], K: [B, Dk, P], V: [B, Dv, P] (PyTorch layout), mask: [B, P]|None.
    Pass kv_transposed=True to supply K as [B, P, Dk] and V as [B, P, Dv]
    directly (lane-dense layout, skips the wrapper-side transpose pass).
    K/V may be bf16; they are upcast to f32 inside the kernel.
    """
    if not kv_transposed:
        K = jnp.swapaxes(K, 1, 2)   # (B, P, Dk) -- lane-dense in Dk
        V = jnp.swapaxes(V, 1, 2)   # (B, P, Dv) -- lane-dense in Dv
    B, Dk = Q.shape
    assert K.shape[0] == B and K.shape[2] == Dk
    P = K.shape[1]
    Dv = V.shape[2]
    assert V.shape == (B, P, Dv)
    if mask is not None:
        assert mask.shape == (B, P)

    scale = float(1.0 / (Dk ** 0.5))  # matches torch.tensor(1.0 / key_dimension**0.5)
    has_mask = mask is not None
    vmem_limit = _vmem_limit_bytes()

    TB = block_b if block_b is not None else _choose_batch_block(
        B, Dk, Dv, P, has_mask, vmem_limit)
    # Partial last block (B % TB != 0) is handled by Pallas masked writeback --
    # no jnp.pad (which would cost an extra full HBM pass over K/V).
    grid = (pl.cdiv(B, TB),)

    in_specs = [
        pl.BlockSpec((TB, Dk), lambda b: (b, 0)),
        pl.BlockSpec((TB, P, Dk), lambda b: (b, 0, 0)),
        pl.BlockSpec((TB, P, Dv), lambda b: (b, 0, 0)),
    ]
    args = [Q, K, V]
    if has_mask:
        in_specs.append(pl.BlockSpec((TB, P), lambda b: (b, 0)))
        args.append(mask)
        kernel = functools.partial(_attn_kernel_masked, scale)
    else:
        kernel = functools.partial(_attn_kernel_nomask, scale)

    return pl.pallas_call(
        kernel,
        out_shape=jax.ShapeDtypeStruct((B, Dv), Q.dtype),
        grid_spec=pltpu.PrefetchScalarGridSpec(
            num_scalar_prefetch=0,
            grid=grid,
            in_specs=in_specs,
            out_specs=pl.BlockSpec((TB, Dv), lambda b: (b, 0)),
        ),
        compiler_params=pltpu.CompilerParams(
            dimension_semantics=("parallel",),   # shards batch blocks across TCs on v7x
            vmem_limit_bytes=vmem_limit,
        ),
    )(*args)


def _reference(Q, K, V, mask=None):
    Dk = Q.shape[1]
    scale = 1.0 / (Dk ** 0.5)
    energy = jnp.einsum("bd,bdp->bp", Q, K)
    if mask is not None:
        energy = energy * mask.astype(jnp.float32)
    attn = jax.nn.softmax(energy * scale, axis=-1)
    return jnp.einsum("bp,bvp->bv", attn, V)


if __name__ == "__main__":
    key = jax.random.PRNGKey(0)
    kq, kk, kv, km = jax.random.split(key, 4)

    B, Dk, Dv, P = 2, 32, 32, 8
    Q = jax.random.normal(kq, (B, Dk), dtype=jnp.float32)
    K = jax.random.normal(kk, (B, Dk, P), dtype=jnp.float32)
    V = jax.random.normal(kv, (B, Dv, P), dtype=jnp.float32)
    mask = (jax.random.uniform(km, (B, P)) > 0.3).astype(jnp.float32)

    # masked path (single batch block, B <= 8)
    out = dot_product_attention(Q, K, V, mask)
    jax.block_until_ready(out)
    ref = _reference(Q, K, V, mask)
    assert out.shape == (B, Dv)
    assert jnp.allclose(out, ref, atol=1e-4, rtol=1e-4)

    # mask=None specialized path
    out_nomask = dot_product_attention(Q, K, V, None)
    jax.block_until_ready(out_nomask)
    assert jnp.allclose(out_nomask, _reference(Q, K, V, None), atol=1e-4, rtol=1e-4)

    # multi-block path with auto TB sizing: B=20 -> TB=16, grid=2, last block
    # partial (exercises masked writeback instead of wrapper-side padding).
    B2 = 20
    kq2, kk2, kv2, km2 = jax.random.split(jax.random.PRNGKey(1), 4)
    Q2 = jax.random.normal(kq2, (B2, Dk), dtype=jnp.float32)
    K2 = jax.random.normal(kk2, (B2, Dk, P), dtype=jnp.float32)
    V2 = jax.random.normal(kv2, (B2, Dv, P), dtype=jnp.float32)
    mask2 = (jax.random.uniform(km2, (B2, P)) > 0.3).astype(jnp.float32)
    out2 = dot_product_attention(Q2, K2, V2, mask2)
    jax.block_until_ready(out2)
    assert out2.shape == (B2, Dv)
    assert jnp.allclose(out2, _reference(Q2, K2, V2, mask2), atol=1e-4, rtol=1e-4)

    # explicit small block (TB=8, grid=3, ragged tail) for coverage
    out3 = dot_product_attention(Q2, K2, V2, mask2, block_b=8)
    jax.block_until_ready(out3)
    assert jnp.allclose(out3, _reference(Q2, K2, V2, mask2), atol=1e-4, rtol=1e-4)

    print("KERNEL_OK")
</pallas_src>

<mosaic_0001>
module attributes {stable_mosaic.version = 11 : i64} {
  func.func @_attn_kernel_masked(%arg0: i32, %arg1: memref<2x32xf32, #tpu.memory_space<vmem>>, %arg2: memref<2x8x32xf32, #tpu.memory_space<vmem>>, %arg3: memref<2x8x32xf32, #tpu.memory_space<vmem>>, %arg4: memref<2x8xf32, #tpu.memory_space<vmem>>, %arg5: memref<2x32xf32, #tpu.memory_space<vmem>>) attributes {dimension_semantics = [#tpu.dimension_semantics<parallel>], iteration_bounds = array<i64: 1>, scalar_prefetch = 0 : i64, scratch_operands = 0 : i64, tpu.core_type = #tpu.core_type<tc>, window_params = [{transform_indices = @transform_0, window_bounds = array<i64: 2, 32>}, {transform_indices = @transform_1, window_bounds = array<i64: 2, 8, 32>}, {transform_indices = @transform_2, window_bounds = array<i64: 2, 8, 32>}, {transform_indices = @transform_3, window_bounds = array<i64: 2, 8>}, {transform_indices = @transform_4, window_bounds = array<i64: 2, 32>}]} {
    %c0 = arith.constant 0 : index
    %c0_0 = arith.constant 0 : index
    %0 = vector.load %arg1[%c0, %c0_0] : memref<2x32xf32, #tpu.memory_space<vmem>>, vector<2x32xf32>
    %cst = arith.constant 0.176776692 : f32
    %1 = vector.broadcast %cst : f32 to vector<2x32xf32>
    %2 = arith.mulf %0, %1 : vector<2x32xf32>
    %c0_1 = arith.constant 0 : index
    %c0_2 = arith.constant 0 : index
    %c0_3 = arith.constant 0 : index
    %3 = vector.load %arg2[%c0_1, %c0_2, %c0_3] : memref<2x8x32xf32, #tpu.memory_space<vmem>>, vector<2x8x32xf32>
    %4 = vector.shape_cast %2 : vector<2x32xf32> to vector<2x1x32xf32>
    %5 = vector.broadcast %4 : vector<2x1x32xf32> to vector<2x8x32xf32>
    %6 = arith.mulf %5, %3 : vector<2x8x32xf32>
    %cst_4 = arith.constant dense<0.000000e+00> : vector<2x8xf32>
    %7 = vector.multi_reduction <add>, %6, %cst_4 [2] : vector<2x8x32xf32> to vector<2x8xf32>
    %c0_5 = arith.constant 0 : index
    %c0_6 = arith.constant 0 : index
    %8 = vector.load %arg4[%c0_5, %c0_6] : memref<2x8xf32, #tpu.memory_space<vmem>>, vector<2x8xf32>
    %9 = arith.mulf %7, %8 : vector<2x8xf32>
    %cst_7 = arith.constant dense<0xFF800000> : vector<2xf32>
    %10 = vector.multi_reduction <maximumf>, %9, %cst_7 [1] : vector<2x8xf32> to vector<2xf32>
    %11 = vector.shape_cast %10 : vector<2xf32> to vector<2x1xf32>
    %12 = vector.broadcast %11 : vector<2x1xf32> to vector<2x8xf32>
    %13 = arith.subf %9, %12 : vector<2x8xf32>
    %14 = math.exp %13 : vector<2x8xf32>
    %cst_8 = arith.constant dense<0.000000e+00> : vector<2xf32>
    %15 = vector.multi_reduction <add>, %14, %cst_8 [1] : vector<2x8xf32> to vector<2xf32>
    %16 = vector.shape_cast %15 : vector<2xf32> to vector<2x1xf32>
    %17 = tpu.reciprocal %16 {approx = true} : vector<2x1xf32> -> vector<2x1xf32>
    %18 = arith.mulf %16, %17 : vector<2x1xf32>
    %cst_9 = arith.constant 2.000000e+00 : f32
    %19 = vector.broadcast %cst_9 : f32 to vector<2x1xf32>
    %20 = arith.subf %19, %18 : vector<2x1xf32>
    %21 = arith.mulf %17, %20 : vector<2x1xf32>
    %22 = vector.broadcast %21 : vector<2x1xf32> to vector<2x8xf32>
    %23 = arith.mulf %14, %22 : vector<2x8xf32>
    %c0_10 = arith.constant 0 : index
    %c0_11 = arith.constant 0 : index
    %c0_12 = arith.constant 0 : index
    %24 = vector.load %arg3[%c0_10, %c0_11, %c0_12] : memref<2x8x32xf32, #tpu.memory_space<vmem>>, vector<2x8x32xf32>
    %25 = vector.shape_cast %23 : vector<2x8xf32> to vector<2x8x1xf32>
    %26 = vector.broadcast %25 : vector<2x8x1xf32> to vector<2x8x32xf32>
    %27 = arith.mulf %26, %24 : vector<2x8x32xf32>
    %cst_13 = arith.constant dense<0.000000e+00> : vector<2x32xf32>
    %28 = vector.multi_reduction <add>, %27, %cst_13 [1] : vector<2x8x32xf32> to vector<2x32xf32>
    %c0_14 = arith.constant 0 : index
    %c0_15 = arith.constant 0 : index
    %29 = vector.load %arg5[%c0_14, %c0_15] : memref<2x32xf32, #tpu.memory_space<vmem>>, vector<2x32xf32>
    tpu.vector_store %arg5[%c0_14, %c0_15], %28 {strides = array<i32>} : memref<2x32xf32, #tpu.memory_space<vmem>>, vector<2x32xf32>,
    return
  }
  func.func @transform_0(%arg0: i32) -> (i32, i32) {
    %c0_i32 = arith.constant 0 : i32
    %c0_i32_0 = arith.constant 0 : i32
    return %arg0, %c0_i32 : i32, i32
  }
  func.func @transform_1(%arg0: i32) -> (i32, i32, i32) {
    %c0_i32 = arith.constant 0 : i32
    %c0_i32_0 = arith.constant 0 : i32
    %c0_i32_1 = arith.constant 0 : i32
    return %arg0, %c0_i32, %c0_i32_0 : i32, i32, i32
  }
  func.func @transform_2(%arg0: i32) -> (i32, i32, i32) {
    %c0_i32 = arith.constant 0 : i32
    %c0_i32_0 = arith.constant 0 : i32
    %c0_i32_1 = arith.constant 0 : i32
    return %arg0, %c0_i32, %c0_i32_0 : i32, i32, i32
  }
  func.func @transform_3(%arg0: i32) -> (i32, i32) {
    %c0_i32 = arith.constant 0 : i32
    %c0_i32_0 = arith.constant 0 : i32
    return %arg0, %c0_i32 : i32, i32
  }
  func.func @transform_4(%arg0: i32) -> (i32, i32) {
    %c0_i32 = arith.constant 0 : i32
    %c0_i32_0 = arith.constant 0 : i32
    return %arg0, %c0_i32 : i32, i32
  }
}

</mosaic_0001>

<llo_original>
// kernel: tpu_custom_call.1
$region0: #{tpu_custom_call.1}
  #allocation0 [shape = 'u32[]', space=smem, size = 0x4, offset = 0x4, fixed_abs, tag = 'smem constant byte address 0x4 - core index']
  #allocation1 [shape = 'u32[144,128]{1,0:T(1,128)}', space=vmem, size = 0x12000, scoped, tag = 'internal scratch']
  %s0 = inlined_call_operand.hbm [shape: f32[2,32], index: 0, kind: input, shape index: {}]
  %s1 = inlined_call_operand.hbm [shape: f32[2,8,32], index: 1, kind: input, shape index: {}]
  %s2 = inlined_call_operand.hbm [shape: f32[2,8,32], index: 2, kind: input, shape index: {}]
  %s3 = inlined_call_operand.hbm [shape: f32[2,8], index: 3, kind: input, shape index: {}]
  %s4 = inlined_call_operand.hbm [shape: f32[2,32], index: 4, kind: output, shape index: {}]
  %s5 = sld [smem:[#allocation0]]
  $region42: #{tpu_custom_call.1} parent=0
    _
  %s7 = ssub.s32 1, %s5
  %s8 = scalar_select 0, %s7, %s5
  $region1: #{tpu_custom_call.1} parent=0
    #allocation2 [shape = 'u8[1024]{0}', space=vmem, size = 0x400, scoped, tag = 'input window, operand 0, single buffered']
    #allocation3 [shape = 's32[1]{0}', space=sflag, size = 0x4, scoped, tag = 'scoped memory for tpu_custom_call.1']
    #allocation4 [shape = 's32[1]{0}', space=sflag, size = 0x4, scoped, tag = 'scoped memory for tpu_custom_call.1']
    #allocation5 [shape = 'u8[8192]{0}', space=vmem, size = 0x2000, scoped, tag = 'input window, operand 1, single buffered']
    #allocation6 [shape = 's32[1]{0}', space=sflag, size = 0x4, scoped, tag = 'scoped memory for tpu_custom_call.1']
    #allocation7 [shape = 'u8[8192]{0}', space=vmem, size = 0x2000, scoped, tag = 'input window, operand 2, single buffered']
    #allocation8 [shape = 'u8[1024]{0}', space=vmem, size = 0x400, scoped, tag = 'input window, operand 3, single buffered']
    #allocation9 [shape = 's32[1]{0}', space=sflag, size = 0x4, scoped, tag = 'scoped memory for tpu_custom_call.1']
    #allocation10 [shape = 'u8[1024]{0}', space=vmem, size = 0x400, scoped, tag = 'output window, operand 0, single buffered']
    %9 = vsyncpa [#allocation3], 0
    %10 = vsyncpa [#allocation6], 0
    %11 = vsyncpa [#allocation9], 0
    %12 = vsyncpa [#allocation4], 0
    // Predicated region
    $region2: #{tpu_custom_call.1} parent=1 // pred_check
      _
    $region3: #{tpu_custom_call.1} parent=1 // pred_check_branch
      %14 = sbr.rel (0) target = $region5
    $region4: #{tpu_custom_call.1} parent=1 // pred_region
      %s16 = ssub.s32 32, 32
      %17 = vsyncadd [#allocation3], %s16
      %s19 = sshll.u32 [#allocation2], 4
      %s20 = int_to_ptr.vmem [resolvable:$true] %s19
      %22 = dma.hbm_to_vmem [thread:$0]  %s0, 32, %s20, [#allocation3]
    $region5: #{tpu_custom_call.1} parent=1 // pred_fallthru
      _
    // Predicated region
    $region6: #{tpu_custom_call.1} parent=1 // pred_check
      _
    $region7: #{tpu_custom_call.1} parent=1 // pred_check_branch
      %24 = sbr.rel (0) target = $region9
    $region8: #{tpu_custom_call.1} parent=1 // pred_region
      %s26 = ssub.s32 256, 256
      %27 = vsyncadd [#allocation6], %s26
      %s28 = sshll.u32 [#allocation5], 4
      %s29 = int_to_ptr.vmem [resolvable:$true] %s28
      %34 = dma.hbm_to_vmem [thread:$0]  %s1, 256, %s29, [#allocation6], 128, 128, 8
    $region9: #{tpu_custom_call.1} parent=1 // pred_fallthru
      _
    // Predicated region
    $region10: #{tpu_custom_call.1} parent=1 // pred_check
      _
    $region11: #{tpu_custom_call.1} parent=1 // pred_check_branch
      %36 = sbr.rel (0) target = $region13
    $region12: #{tpu_custom_call.1} parent=1 // pred_region
      %s38 = ssub.s32 256, 256
      %39 = vsyncadd [#allocation6], %s38
      %s40 = sshll.u32 [#allocation7], 4
      %s41 = int_to_ptr.vmem [resolvable:$true] %s40
      %46 = dma.hbm_to_vmem [thread:$0]  %s2, 256, %s41, [#allocation6], 128, 128, 8
    $region13: #{tpu_custom_call.1} parent=1 // pred_fallthru
      _
    // Predicated region
    $region14: #{tpu_custom_call.1} parent=1 // pred_check
      _
    $region15: #{tpu_custom_call.1} parent=1 // pred_check_branch
      %48 = sbr.rel (0) target = $region17
    $region16: #{tpu_custom_call.1} parent=1 // pred_region
      %s50 = ssub.s32 32, 32
      %51 = vsyncadd [#allocation9], %s50
      %s53 = sshll.u32 [#allocation8], 4
      %s54 = int_to_ptr.vmem [resolvable:$true] %s53
      %56 = dma.hbm_to_vmem [thread:$0]  %s3, 32, %s54, [#allocation9]
    $region17: #{tpu_custom_call.1} parent=1 // pred_fallthru
      _
    // Predicated region
    $region18: #{tpu_custom_call.1} parent=1 // pred_check
      _
    $region19: #{tpu_custom_call.1} parent=1 // pred_check_branch
      %58 = sbr.rel (0) target = $region21
    $region20: #{tpu_custom_call.1} parent=1 // pred_region
      %59 = dma.done [#allocation3], 32
    $region21: #{tpu_custom_call.1} parent=1 // pred_fallthru
      _
    // Predicated region
    $region22: #{tpu_custom_call.1} parent=1 // pred_check
      _
    $region23: #{tpu_custom_call.1} parent=1 // pred_check_branch
      %61 = sbr.rel (0) target = $region25
    $region24: #{tpu_custom_call.1} parent=1 // pred_region
      %62 = dma.done [#allocation6], 256
    $region25: #{tpu_custom_call.1} parent=1 // pred_fallthru
      _
    // Predicated region
    $region26: #{tpu_custom_call.1} parent=1 // pred_check
      _
    $region27: #{tpu_custom_call.1} parent=1 // pred_check_branch
      %64 = sbr.rel (0) target = $region29
    $region28: #{tpu_custom_call.1} parent=1 // pred_region
      %65 = dma.done [#allocation6], 256
    $region29: #{tpu_custom_call.1} parent=1 // pred_fallthru
      _
    // Predicated region
    $region30: #{tpu_custom_call.1} parent=1 // pred_check
      _
    $region31: #{tpu_custom_call.1} parent=1 // pred_check_branch
      %67 = sbr.rel (0) target = $region33
    $region32: #{tpu_custom_call.1} parent=1 // pred_region
      %68 = dma.done [#allocation9], 32
    $region33: #{tpu_custom_call.1} parent=1 // pred_fallthru
      _
    %v69 = vld [vmem:[#allocation2] sm:$0x3]
    %v70 = vmul.f32 %v69, 0.17677669
    %v71 = vld [vmem:[#allocation5] sm:$0xff]
    %v72 = vld [vmem:[#allocation5 + $0x8] sm:$0xff]
    %v75 = vunpack.c.l.s4 1966171168
    %v76 = vunpack.c.0.s8 %v75
    %v77 = vlaneseq
    %v78 = vshrl.u32 %v77, 7
    %v79 = vsub.s32 %v76, %v78
    %v80 = vrot.slane %v70, %v79
    %v81 = vcombine.high %v80, %v80
    %v83 = vunpack.c.l.s4 1966171168
    %v84 = vunpack.c.0.s8 %v83
    %v85 = vlaneseq
    %v86 = vshrl.u32 %v85, 7
    %v87 = vsub.s32 %v84, %v86
    %v88 = vrot.slane %v80, %v87
    %v90 = vunpack.c.l.s4 1966171168
    %v91 = vunpack.c.0.s8 %v90
    %v92 = vlaneseq
    %v93 = vshrl.u32 %v92, 7
    %v94 = vsub.s32 %v91, %v93
    %v95 = vrot.slane %v81, %v94
    %v96 = vlaneseq
    %v97 = vshrl.u32 %v96, 7
    %v98 = vsub.s32 0, %v97
    %v99 = vrot.slane %v88, %v98
    %v100 = vlaneseq
    %v101 = vshrl.u32 %v100, 7
    %v102 = vsub.s32 0, %v101
    %v103 = vrot.slane %v95, %v102
    %v106 = vmul.f32 %v99, %v71
    %v107 = vmul.f32 %v103, %v72
    %vm108 = vcmask 261120
    %v109 = vsel %vm108, %v106, 0.0
    %110 = vadd.xlane.f32.xlu0 %v109
    %v111 = vpop.xlane.xlu0 %110
    %v112 = vsel %vm108, %v107, 0.0
    %113 = vadd.xlane.f32.xlu0 %v112
    %v114 = vpop.xlane.xlu0 %113
    %v115 = vld [vmem:[#allocation8] sm:$0x3]
    %v117 = vlaneseq
    %v118 = vshrl.u32 %v117, 7
    %v119 = vsub.s32 0, %v118
    %v120 = vrot.slane %v115, %v119
    %122 = vbcast.lane.b32.xlu0 %v120, 256
    %v123 = vpop.permute.xlu0 %122
    %v124 = vlaneseq
    %v125 = vshrl.u32 %v124, 7
    %v126 = vsub.s32 1, %v125
    %v127 = vrot.slane %v115, %v126
    %129 = vbcast.lane.b32.xlu0 %v127, 256
    %v130 = vpop.permute.xlu0 %129
    %v133 = vmul.f32 %v111, %v123
    %v134 = vmul.f32 %v114, %v130
    %137 = vset.pattern.permute.xlu0 0
    %138 = vperm.xlu0 %137, %v133
    %v139 = vpop.permute.xlu0 %138
    %140 = vset.pattern.permute.xlu0 0
    %141 = vperm.xlu0 %140, %v134
    %v142 = vpop.permute.xlu0 %141
    %v143 = vlaneseq
    %v144 = vand.u32 %v143, 127
    %v145 = vlaneseq
    %v146 = vshrl.u32 %v145, 7
    %v147 = vsub.s32 %v144, %v146
    %v148 = vrot.slane %v139, %v147
    %v149 = vlaneseq
    %v150 = vshrl.u32 %v149, 7
    %v151 = vsub.s32 %v144, %v150
    %v152 = vrot.slane %v142, %v151
    %vm153 = vcmask 1041409
    %v154 = vsel %vm153, %v152, %v148
    %vm156 = vcmask 58368
    %v157 = vsel %vm156, %v154, -inf
    %158 = vmax.xlane.f32.xlu0 %v157
    %v159 = vpop.xlane.xlu0 %158
    %v161 = vlaneseq
    %v162 = vshrl.u32 %v161, 7
    %v163 = vsub.s32 0, %v162
    %v164 = vrot.slane %v159, %v163
    %v165 = vlaneseq
    %v166 = vshrl.u32 %v165, 7
    %v167 = vsub.s32 1, %v166
    %v168 = vrot.slane %v159, %v167
    %v171 = vsub.f32 %v133, %v164
    %v172 = vsub.f32 %v134, %v168
    %v173 = vmul.f32 %v171, 1.442695
    %v174 = vpow.pop %v173
    %v175 = vmul.f32 %v172, 1.442695
    %v176 = vpow.pop %v175
    %179 = vset.pattern.permute.xlu0 0
    %180 = vperm.xlu0 %179, %v174
    %v181 = vpop.permute.xlu0 %180
    %182 = vset.pattern.permute.xlu0 0
    %183 = vperm.xlu0 %182, %v176
    %v184 = vpop.permute.xlu0 %183
    %v185 = vlaneseq
    %v186 = vshrl.u32 %v185, 7
    %v187 = vsub.s32 %v144, %v186
    %v188 = vrot.slane %v181, %v187
    %v189 = vlaneseq
    %v190 = vshrl.u32 %v189, 7
    %v191 = vsub.s32 %v144, %v190
    %v192 = vrot.slane %v184, %v191
    %v193 = vsel %vm153, %v192, %v188
    %v195 = vsel %vm156, %v193, 0.0
    %196 = vadd.xlane.f32.xlu0 %v195
    %v197 = vpop.xlane.xlu0 %196
    %v198 = vrcp.pop %v197
    %v199 = vmul.f32 %v197, %v198
    %v200 = vsub.f32 2.0, %v199
    %v201 = vmul.f32 %v198, %v200
    %v203 = vlaneseq
    %v204 = vshrl.u32 %v203, 7
    %v205 = vsub.s32 0, %v204
    %v206 = vrot.slane %v201, %v205
    %v207 = vlaneseq
    %v208 = vshrl.u32 %v207, 7
    %v209 = vsub.s32 1, %v208
    %v210 = vrot.slane %v201, %v209
    %v213 = vmul.f32 %v174, %v206
    %v214 = vmul.f32 %v176, %v210
    %v215 = vld [vmem:[#allocation7] sm:$0xff]
    %v216 = vld [vmem:[#allocation7 + $0x8] sm:$0xff]
    %218 = vset.pattern.permute.xlu0 0
    %219 = vperm.xlu0 %218, %v213
    %v220 = vpop.permute.xlu0 %219
    %223 = vset.pattern.permute.xlu0 0
    %224 = vperm.xlu0 %223, %v214
    %v225 = vpop.permute.xlu0 %224
    %v227 = vmul.f32 %v220, %v215
    %v228 = vmul.f32 %v225, %v216
    %v229 = vsel %vm108, %v227, 0.0
    %v230 = vrot.slane %v229, 4
    %v231 = vadd.f32 %v229, %v230
    %v232 = vrot.slane %v231, 2
    %v233 = vadd.f32 %v231, %v232
    %v234 = vrot.slane %v233, 1
    %v235 = vadd.f32 %v233, %v234
    %v236 = vsel %vm108, %v228, 0.0
    %v237 = vrot.slane %v236, 4
    %v238 = vadd.f32 %v236, %v237
    %v239 = vrot.slane %v238, 2
    %v240 = vadd.f32 %v238, %v239
    %v241 = vrot.slane %v240, 1
    %v242 = vadd.f32 %v240, %v241
    %v245 = vsel %vm153, %v242, %v235
    %vm247 = vcmask 254976
    %248 = vst.msk [vmem:[#allocation10] sm:$0x3] %vm247, %v245
    // Predicated region
    $region34: #{tpu_custom_call.1} parent=1 // pred_check
      _
    $region35: #{tpu_custom_call.1} parent=1 // pred_check_branch
      %250 = sbr.rel (0) target = $region37
    $region36: #{tpu_custom_call.1} parent=1 // pred_region
      %s252 = ssub.s32 32, 32
      %253 = vsyncadd [#allocation4], %s252
      %s255 = sshll.u32 [#allocation10], 4
      %s256 = int_to_ptr.vmem [resolvable:$true] %s255
      %258 = dma.vmem_to_hbm [thread:$0]  %s256, 32, %s4, [#allocation4]
    $region37: #{tpu_custom_call.1} parent=1 // pred_fallthru
      _
    // Predicated region
    $region38: #{tpu_custom_call.1} parent=1 // pred_check
      _
    $region39: #{tpu_custom_call.1} parent=1 // pred_check_branch
      %260 = sbr.rel (0) target = $region41
    $region40: #{tpu_custom_call.1} parent=1 // pred_region
      %261 = dma.done [#allocation4], 32
    $region41: #{tpu_custom_call.1} parent=1 // pred_fallthru
      _
    %262 = vsyncpa [#allocation3], 1
    %263 = vsyncpa [#allocation6], 1
    %264 = vsyncpa [#allocation9], 1
    %265 = vsyncpa [#allocation4], 1

</llo_original>
